<compile_context>
chip_gen: v6e
topology: v6e:2x2x1
jax: 0.10.0
libtpu: 0.0.40
codegen_flags: <defaults>
</compile_context>

<pallas_src>
import math

import numpy as np
import jax
import jax.numpy as jnp
from jax import lax
from jax.experimental import pallas as pl
from jax.experimental.pallas import tpu as pltpu

# ----------------------------- model config -----------------------------
N = 2             # batch
S = 8             # sequence length
E = 32            # embed_size
H = 4             # heads
D = E // H        # head_dim
C = 5             # num_classes
NS = N * S        # 16  (all keys/values, batch-concatenated)
HNS = N * H * S   # 64  (stacked per-head query rows, batch-concatenated)
SCALE = 1.0 / math.sqrt(E)   # folded into Wq at pack time
NEG_INF = -1e20              # additive mask value (host-side only)

# packed-weight row layout (width = 128 lanes)
R_WQ = 0                     # block-diag Wq * SCALE     rows [  0,  32), lanes 0:E
R_WK = 32                    # block-diag Wk             rows [ 32,  64), lanes 0:E
R_WV = 64                    # block-diag Wv             rows [ 64,  96), lanes 0:E
R_REP = 96                   # query replication (HNS,NS)rows [ 96, 160), lanes 0:NS
R_HM = R_REP + HNS           # head lane mask (HNS,E)    rows [160, 224), lanes 0:E
R_BM = R_HM + HNS            # cross-batch mask (HNS,NS) rows [224, 288), lanes 0:NS
R_POOL = R_BM + HNS          # mean-pool selector (8,HNS)rows [288, 296), lanes 0:HNS
R_WC = R_POOL + 8            # folded classifier (E,128) rows [296, 328)
R_BC = R_WC + E              # folded bias row           rows [328, 336) (row 0 used)
R_TOTAL = R_BC + 8           # 336 rows total


# ------------------------------ Pallas kernel ------------------------------
def aspect_kernel(xm_ref, w_ref, out_ref):
    # xm_ref:  (NS + 8, E) f32  rows 0:NS = x (batch flattened on sublanes),
    #                           row NS lanes 0:NS = additive key-mask bias (0 / -1e20)
    # w_ref:   (R_TOTAL, 128) f32 packed constants (see layout above)
    # out_ref: (8, 128) f32  log-probs in rows 0:N, lanes 0:C
    x = xm_ref[0:NS, :]                                  # (NS, E)
    key_bias = xm_ref[NS:NS + 1, 0:NS]                   # (1, NS)

    wq = w_ref[R_WQ:R_WQ + E, 0:E]                       # (E, E) block-diag, scale folded
    wk = w_ref[R_WK:R_WK + E, 0:E]
    wv = w_ref[R_WV:R_WV + E, 0:E]
    rep = w_ref[R_REP:R_REP + HNS, 0:NS]                 # (HNS, NS) 0/1 replication
    hmask = w_ref[R_HM:R_HM + HNS, 0:E]                  # (HNS, E) head lane mask
    bmask = w_ref[R_BM:R_BM + HNS, 0:NS]                 # (HNS, NS) cross-batch 0/-1e20
    pool = w_ref[R_POOL:R_POOL + 8, 0:HNS]               # (8, HNS) 1/S selector
    wcls = w_ref[R_WC:R_WC + E, :]                       # (E, 128) folded Wo@Wfc (padded)
    bcls = w_ref[R_BC:R_BC + 1, :]                       # (1, 128) folded bias (-1e30 pad)

    # fused Q/K/V projections over batch and heads (block-diagonal weights)
    q = jnp.dot(x, wq, preferred_element_type=jnp.float32)    # (NS, E), pre-scaled
    k = jnp.dot(x, wk, preferred_element_type=jnp.float32)
    v = jnp.dot(x, wv, preferred_element_type=jnp.float32)

    # per-head stacked queries for the whole batch via one MXU push (no sublane copies)
    q_stack = jnp.dot(rep, q, preferred_element_type=jnp.float32) * hmask   # (HNS, E)

    # energies for every (batch, head, query, key) in one matmul (no explicit k.T)
    e = lax.dot_general(q_stack, k, (((1,), (1,)), ((), ())),
                        preferred_element_type=jnp.float32)                 # (HNS, NS)
    e = e + bmask + key_bias                              # kill cross-batch + masked keys

    # single stable softmax over the key axis covers all batches and heads
    e = e - jnp.max(e, axis=-1, keepdims=True)
    p = jnp.exp(e)
    p = p * pl.reciprocal(jnp.sum(p, axis=-1, keepdims=True), approx=False)

    # P@V for all heads/batches; head mask selects each row's lane block
    m = jnp.dot(p, v, preferred_element_type=jnp.float32) * hmask           # (HNS, E)

    # head-concat + mean-pool on the MXU (1/S folded into the selector)
    pooled = jnp.dot(pool, m, preferred_element_type=jnp.float32)           # (8, E)

    # folded output-projection + classifier, then log_softmax (padding lanes are -1e30)
    cls = jnp.dot(pooled, wcls, preferred_element_type=jnp.float32) + bcls  # (8, 128)
    cls = cls - jnp.max(cls, axis=-1, keepdims=True)
    out_ref[...] = cls - jnp.log(jnp.sum(jnp.exp(cls), axis=-1, keepdims=True))


# ------------------------------ host-side packing (one-time) ------------------------------
def pack_params(wq_t, wk_t, wv_t, wo_t, bo, wfc_t, bfc):
    w = np.zeros((R_TOTAL, 128), np.float32)

    def block_diag(m, scale=1.0):
        out = np.zeros((E, E), np.float32)
        mm = np.asarray(m, np.float32) * scale
        for h in range(H):
            out[h * D:(h + 1) * D, h * D:(h + 1) * D] = mm
        return out

    w[R_WQ:R_WQ + E, :E] = block_diag(wq_t, SCALE)        # 1/sqrt(E) folded into Wq
    w[R_WK:R_WK + E, :E] = block_diag(wk_t)
    w[R_WV:R_WV + E, :E] = block_diag(wv_t)

    r = np.arange(HNS)
    n_of_r = r // (H * S)          # batch of stacked-query row
    h_of_r = (r // S) % H          # head  of stacked-query row
    i_of_r = r % S                 # seq   of stacked-query row

    rep = np.zeros((HNS, NS), np.float32)                 # row (n,h,i) selects x-row (n,i)
    rep[r, n_of_r * S + i_of_r] = 1.0
    w[R_REP:R_REP + HNS, :NS] = rep

    d = np.arange(E)
    w[R_HM:R_HM + HNS, :E] = (h_of_r[:, None] == (d[None, :] // D)).astype(np.float32)

    c = np.arange(NS)
    w[R_BM:R_BM + HNS, :NS] = np.where(n_of_r[:, None] == (c[None, :] // S),
                                       0.0, NEG_INF).astype(np.float32)

    pool = np.zeros((8, HNS), np.float32)                 # rows N..7 stay zero
    pool[n_of_r, r] = 1.0 / S
    w[R_POOL:R_POOL + 8, :HNS] = pool

    # fold Wo/bo and Wfc/bfc into a single classifier (pure linear composition)
    wcls = np.asarray(jnp.matmul(wo_t, wfc_t), np.float32)             # (E, C)
    bcls = np.asarray(jnp.matmul(bo, wfc_t) + bfc, np.float32)         # (1, C)
    w[R_WC:R_WC + E, :C] = wcls
    w[R_BC, :C] = bcls[0]
    w[R_BC, C:] = -1e30          # neutralize padding lanes for the in-kernel log-softmax
    return jnp.asarray(w)


# ------------------------------ wrapper ------------------------------
@jax.jit
def aspect_extraction_forward(x, mask, w_pack):
    x_flat = x.reshape(N * S, E).astype(jnp.float32)                   # (NS, E)
    key_bias = jnp.where(mask.reshape(1, N * S) == 0,
                         jnp.float32(NEG_INF), jnp.float32(0.0))       # (1, NS)
    # merge the per-call key-mask bias into the activation buffer: 2 input DMAs total
    xm = jnp.concatenate([x_flat, jnp.pad(key_bias, ((0, 7), (0, E - NS)))], axis=0)

    out = pl.pallas_call(
        aspect_kernel,
        out_shape=jax.ShapeDtypeStruct((8, 128), jnp.float32),          # lane-dense store
        in_specs=[pl.BlockSpec(memory_space=pltpu.MemorySpace.VMEM),    # x + mask bias
                  pl.BlockSpec(memory_space=pltpu.MemorySpace.VMEM)],   # packed weights
        out_specs=pl.BlockSpec(memory_space=pltpu.MemorySpace.VMEM),
    )(xm, w_pack)
    return out[:N, :C]


# ------------------------------ pure-JAX reference ------------------------------
def reference_forward(x, mask, params):
    wq_t, wk_t, wv_t, wo_t, bo, wfc_t, bfc = params
    n, s, e = x.shape
    xh = x.reshape(n, s, H, D)
    q = jnp.einsum("nshd,de->nshe", xh, wq_t)
    k = jnp.einsum("nshd,de->nshe", xh, wk_t)
    v = jnp.einsum("nshd,de->nshe", xh, wv_t)
    energy = jnp.einsum("nqhd,nkhd->nhqk", q, k)
    m = mask.reshape(n, 1, 1, s)
    energy = jnp.where(m == 0, -1e20, energy)
    attn = jax.nn.softmax(energy / jnp.sqrt(jnp.float32(e)), axis=3)
    out = jnp.einsum("nhqk,nkhd->nqhd", attn, v).reshape(n, s, e)
    out = out @ wo_t + bo.reshape(1, 1, e)
    out = out.mean(axis=1)
    logits = out @ wfc_t + bfc.reshape(1, C)
    return jax.nn.log_softmax(logits, axis=1)


# ------------------------------ main ------------------------------
if __name__ == "__main__":
    key = jax.random.PRNGKey(0)
    k_x, k_q, k_k, k_v, k_o, k_bo, k_fc, k_bfc = jax.random.split(key, 8)

    # synthetic params; PyTorch nn.Linear weight (out,in) is stored transposed as (in,out)
    wq_t = jax.random.normal(k_q, (D, D), jnp.float32) * 0.1
    wk_t = jax.random.normal(k_k, (D, D), jnp.float32) * 0.1
    wv_t = jax.random.normal(k_v, (D, D), jnp.float32) * 0.1
    wo_t = jax.random.normal(k_o, (E, E), jnp.float32) * 0.1
    bo = jax.random.normal(k_bo, (1, E), jnp.float32) * 0.1
    wfc_t = jax.random.normal(k_fc, (E, C), jnp.float32) * 0.1
    bfc = jax.random.normal(k_bfc, (1, C), jnp.float32) * 0.1
    params = (wq_t, wk_t, wv_t, wo_t, bo, wfc_t, bfc)

    # inputs
    x = jax.random.normal(k_x, (N, S, E), jnp.float32)
    mask = jnp.ones((N, 1, S), jnp.int32)
    mask = mask.at[1, 0, S - 3:].set(0)      # second example: last 3 key positions masked

    w_pack = pack_params(*params)            # host-side packing (one-time)

    out = aspect_extraction_forward(x, mask, w_pack)
    out = jax.block_until_ready(out)

    ref = reference_forward(x, mask, params)
    assert out.shape == (N, C)
    assert jnp.allclose(out, ref, atol=2e-3, rtol=2e-3), (out, ref)

    print("KERNEL_OK")
</pallas_src>

<mosaic_0001>
module attributes {stable_mosaic.version = 11 : i64} {
  func.func @aspect_kernel(%arg0: memref<24x32xf32, #tpu.memory_space<vmem>>, %arg1: memref<336x128xf32, #tpu.memory_space<vmem>>, %arg2: memref<8x128xf32, #tpu.memory_space<vmem>>) attributes {dimension_semantics = [], scalar_prefetch = 0 : i64, scratch_operands = 0 : i64, tpu.core_type = #tpu.core_type<tc>} {
    %c0 = arith.constant 0 : index
    %c0_0 = arith.constant 0 : index
    %0 = vector.load %arg0[%c0, %c0_0] : memref<24x32xf32, #tpu.memory_space<vmem>>, vector<16x32xf32>
    %c16 = arith.constant 16 : index
    %c0_1 = arith.constant 0 : index
    %1 = vector.load %arg0[%c16, %c0_1] : memref<24x32xf32, #tpu.memory_space<vmem>>, vector<1x16xf32>
    %c0_2 = arith.constant 0 : index
    %c0_3 = arith.constant 0 : index
    %2 = vector.load %arg1[%c0_2, %c0_3] : memref<336x128xf32, #tpu.memory_space<vmem>>, vector<32x32xf32>
    %c32 = arith.constant 32 : index
    %c0_4 = arith.constant 0 : index
    %3 = vector.load %arg1[%c32, %c0_4] : memref<336x128xf32, #tpu.memory_space<vmem>>, vector<32x32xf32>
    %c64 = arith.constant 64 : index
    %c0_5 = arith.constant 0 : index
    %4 = vector.load %arg1[%c64, %c0_5] : memref<336x128xf32, #tpu.memory_space<vmem>>, vector<32x32xf32>
    %c96 = arith.constant 96 : index
    %c0_6 = arith.constant 0 : index
    %5 = vector.load %arg1[%c96, %c0_6] : memref<336x128xf32, #tpu.memory_space<vmem>>, vector<64x16xf32>
    %c160 = arith.constant 160 : index
    %c0_7 = arith.constant 0 : index
    %6 = vector.load %arg1[%c160, %c0_7] : memref<336x128xf32, #tpu.memory_space<vmem>>, vector<64x32xf32>
    %c224 = arith.constant 224 : index
    %c0_8 = arith.constant 0 : index
    %7 = vector.load %arg1[%c224, %c0_8] : memref<336x128xf32, #tpu.memory_space<vmem>>, vector<64x16xf32>
    %c288 = arith.constant 288 : index
    %c0_9 = arith.constant 0 : index
    %8 = vector.load %arg1[%c288, %c0_9] : memref<336x128xf32, #tpu.memory_space<vmem>>, vector<8x64xf32>
    %c296 = arith.constant 296 : index
    %c0_10 = arith.constant 0 : index
    %9 = vector.load %arg1[%c296, %c0_10] : memref<336x128xf32, #tpu.memory_space<vmem>>, vector<32x128xf32>
    %c328 = arith.constant 328 : index
    %c0_11 = arith.constant 0 : index
    %10 = vector.load %arg1[%c328, %c0_11] : memref<336x128xf32, #tpu.memory_space<vmem>>, vector<1x128xf32>
    %cst = arith.constant dense<0.000000e+00> : vector<16x32xf32>
    %11 = tpu.matmul %0, %2, %cst {dimension_numbers = #tpu.dot_dimension_numbers<[1], [0], [0], [1], [0, 0, 1, 1], [], []>} : vector<16x32xf32>, vector<32x32xf32>, vector<16x32xf32> -> vector<16x32xf32>
    %cst_12 = arith.constant dense<0.000000e+00> : vector<16x32xf32>
    %12 = tpu.matmul %0, %3, %cst_12 {dimension_numbers = #tpu.dot_dimension_numbers<[1], [0], [0], [1], [0, 0, 1, 1], [], []>} : vector<16x32xf32>, vector<32x32xf32>, vector<16x32xf32> -> vector<16x32xf32>
    %cst_13 = arith.constant dense<0.000000e+00> : vector<16x32xf32>
    %13 = tpu.matmul %0, %4, %cst_13 {dimension_numbers = #tpu.dot_dimension_numbers<[1], [0], [0], [1], [0, 0, 1, 1], [], []>} : vector<16x32xf32>, vector<32x32xf32>, vector<16x32xf32> -> vector<16x32xf32>
    %cst_14 = arith.constant dense<0.000000e+00> : vector<64x32xf32>
    %14 = tpu.matmul %5, %11, %cst_14 {dimension_numbers = #tpu.dot_dimension_numbers<[1], [0], [0], [1], [0, 0, 1, 1], [], []>} : vector<64x16xf32>, vector<16x32xf32>, vector<64x32xf32> -> vector<64x32xf32>
    %15 = arith.mulf %14, %6 : vector<64x32xf32>
    %cst_15 = arith.constant dense<0.000000e+00> : vector<64x16xf32>
    %16 = tpu.matmul %15, %12, %cst_15 {dimension_numbers = #tpu.dot_dimension_numbers<[1], [1], [0], [0], [0, 0, 1, 0], [], []>} : vector<64x32xf32>, vector<16x32xf32>, vector<64x16xf32> -> vector<64x16xf32>
    %17 = arith.addf %16, %7 : vector<64x16xf32>
    %18 = vector.broadcast %1 : vector<1x16xf32> to vector<64x16xf32>
    %19 = arith.addf %17, %18 : vector<64x16xf32>
    %cst_16 = arith.constant dense<0xFF800000> : vector<64xf32>
    %20 = vector.multi_reduction <maximumf>, %19, %cst_16 [1] : vector<64x16xf32> to vector<64xf32>
    %21 = vector.shape_cast %20 : vector<64xf32> to vector<64x1xf32>
    %22 = vector.broadcast %21 : vector<64x1xf32> to vector<64x16xf32>
    %23 = arith.subf %19, %22 : vector<64x16xf32>
    %24 = math.exp %23 : vector<64x16xf32>
    %cst_17 = arith.constant dense<0.000000e+00> : vector<64xf32>
    %25 = vector.multi_reduction <add>, %24, %cst_17 [1] : vector<64x16xf32> to vector<64xf32>
    %26 = vector.shape_cast %25 : vector<64xf32> to vector<64x1xf32>
    %27 = tpu.reciprocal %26 : vector<64x1xf32> -> vector<64x1xf32>
    %28 = vector.broadcast %27 : vector<64x1xf32> to vector<64x16xf32>
    %29 = arith.mulf %24, %28 : vector<64x16xf32>
    %cst_18 = arith.constant dense<0.000000e+00> : vector<64x32xf32>
    %30 = tpu.matmul %29, %13, %cst_18 {dimension_numbers = #tpu.dot_dimension_numbers<[1], [0], [0], [1], [0, 0, 1, 1], [], []>} : vector<64x16xf32>, vector<16x32xf32>, vector<64x32xf32> -> vector<64x32xf32>
    %31 = arith.mulf %30, %6 : vector<64x32xf32>
    %cst_19 = arith.constant dense<0.000000e+00> : vector<8x32xf32>
    %32 = tpu.matmul %8, %31, %cst_19 {dimension_numbers = #tpu.dot_dimension_numbers<[1], [0], [0], [1], [0, 0, 1, 1], [], []>} : vector<8x64xf32>, vector<64x32xf32>, vector<8x32xf32> -> vector<8x32xf32>
    %cst_20 = arith.constant dense<0.000000e+00> : vector<8x128xf32>
    %33 = tpu.matmul %32, %9, %cst_20 {dimension_numbers = #tpu.dot_dimension_numbers<[1], [0], [0], [1], [0, 0, 1, 1], [], []>} : vector<8x32xf32>, vector<32x128xf32>, vector<8x128xf32> -> vector<8x128xf32>
    %34 = vector.broadcast %10 : vector<1x128xf32> to vector<8x128xf32>
    %35 = arith.addf %33, %34 : vector<8x128xf32>
    %cst_21 = arith.constant dense<0xFF800000> : vector<8xf32>
    %36 = vector.multi_reduction <maximumf>, %35, %cst_21 [1] : vector<8x128xf32> to vector<8xf32>
    %37 = vector.shape_cast %36 : vector<8xf32> to vector<8x1xf32>
    %38 = vector.broadcast %37 : vector<8x1xf32> to vector<8x128xf32>
    %39 = arith.subf %35, %38 : vector<8x128xf32>
    %40 = math.exp %39 : vector<8x128xf32>
    %cst_22 = arith.constant dense<0.000000e+00> : vector<8xf32>
    %41 = vector.multi_reduction <add>, %40, %cst_22 [1] : vector<8x128xf32> to vector<8xf32>
    %42 = vector.shape_cast %41 : vector<8xf32> to vector<8x1xf32>
    %43 = math.log %42 : vector<8x1xf32>
    %44 = vector.broadcast %43 : vector<8x1xf32> to vector<8x128xf32>
    %45 = arith.subf %39, %44 : vector<8x128xf32>
    %c0_23 = arith.constant 0 : index
    %c0_24 = arith.constant 0 : index
    %46 = vector.load %arg2[%c0_23, %c0_24] : memref<8x128xf32, #tpu.memory_space<vmem>>, vector<8x128xf32>
    tpu.vector_store %arg2[%c0_23, %c0_24], %45 {strides = array<i32>} : memref<8x128xf32, #tpu.memory_space<vmem>>, vector<8x128xf32>,
    return
  }
}

</mosaic_0001>

<llo_original>
// kernel: aspect_extraction_forward.1
$region0: #{aspect_extraction_forward.1}
  #allocation0 [shape = 'u32[]', space=smem, size = 0x4, offset = 0x4, fixed_abs, tag = 'smem constant byte address 0x4 - core index']
  #allocation1 [shape = 'u32[144,128]{1,0:T(1,128)}', space=vmem, size = 0x12000, scoped, tag = 'internal scratch']
  %s0 = inlined_call_operand.vmem [shape: f32[24,32], index: 0, kind: input, shape index: {}]
  %s1 = inlined_call_operand.hbm [shape: f32[336,128], index: 1, kind: input, shape index: {}]
  %s2 = inlined_call_operand.vmem [shape: f32[8,128], index: 2, kind: output, shape index: {}]
  %s3 = sld [smem:[#allocation0]]
  $region22: #{aspect_extraction_forward.1} parent=0
    _
  %s5 = ssub.s32 1, %s3
  %s6 = scalar_select 0, %s5, %s3
  $region1: #{aspect_extraction_forward.1} parent=0
    #allocation2 [shape = 'u8[172032]{0}', space=vmem, size = 0x2a000, scoped, tag = 'input window, operand 1, single buffered']
    #allocation3 [shape = 's32[1]{0}', space=sflag, size = 0x4, scoped, tag = 'scoped memory for aspect_extraction_forward.1']
    %7 = vsyncpa [#allocation3], 0
    // Predicated region
    $region2: #{aspect_extraction_forward.1} parent=1 // pred_check
      _
    $region3: #{aspect_extraction_forward.1} parent=1 // pred_check_branch
      %9 = sbr.rel (0) target = $region5
    $region4: #{aspect_extraction_forward.1} parent=1 // pred_region
      _
    $region5: #{aspect_extraction_forward.1} parent=1 // pred_fallthru
      _
    // Predicated region
    $region6: #{aspect_extraction_forward.1} parent=1 // pred_check
      _
    $region7: #{aspect_extraction_forward.1} parent=1 // pred_check_branch
      %11 = sbr.rel (0) target = $region9
    $region8: #{aspect_extraction_forward.1} parent=1 // pred_region
      %s13 = ssub.s32 5376, 5376
      %14 = vsyncadd [#allocation3], %s13
      %s15 = sshll.u32 [#allocation2], 4
      %s16 = int_to_ptr.vmem [resolvable:$true] %s15
      %21 = dma.hbm_to_vmem [thread:$0]  %s1, 5376, %s16, [#allocation3], 128, 128, 8
    $region9: #{aspect_extraction_forward.1} parent=1 // pred_fallthru
      _
    // Predicated region
    $region10: #{aspect_extraction_forward.1} parent=1 // pred_check
      _
    $region11: #{aspect_extraction_forward.1} parent=1 // pred_check_branch
      %23 = sbr.rel (0) target = $region13
    $region12: #{aspect_extraction_forward.1} parent=1 // pred_region
      %24 = dma.done [#allocation3], 5376
    $region13: #{aspect_extraction_forward.1} parent=1 // pred_fallthru
      _
    %v25 = vld [vmem:[%s0] sm:$0xff]
    %v26 = vld [vmem:[%s0 + $0x8] sm:$0xff]
    %v27 = vld [vmem:[%s0 + $0x10] sm:$0x1]
    %v28 = vld [vmem:[#allocation2] sm:$0xff]
    %v29 = vld [vmem:[#allocation2 + $0x8] sm:$0xff]
    %v30 = vld [vmem:[#allocation2 + $0x10] sm:$0xff]
    %v31 = vld [vmem:[#allocation2 + $0x18] sm:$0xff]
    %v32 = vld [vmem:[#allocation2 + $0x20] sm:$0xff]
    %v33 = vld [vmem:[#allocation2 + $0x28] sm:$0xff]
    %v34 = vld [vmem:[#allocation2 + $0x30] sm:$0xff]
    %v35 = vld [vmem:[#allocation2 + $0x38] sm:$0xff]
    %v36 = vld [vmem:[#allocation2 + $0x40] sm:$0xff]
    %v37 = vld [vmem:[#allocation2 + $0x48] sm:$0xff]
    %v38 = vld [vmem:[#allocation2 + $0x50] sm:$0xff]
    %v39 = vld [vmem:[#allocation2 + $0x58] sm:$0xff]
    %v40 = vld [vmem:[#allocation2 + $0x60] sm:$0xff]
    %v41 = vld [vmem:[#allocation2 + $0x68] sm:$0xff]
    %v42 = vld [vmem:[#allocation2 + $0x70] sm:$0xff]
    %v43 = vld [vmem:[#allocation2 + $0x78] sm:$0xff]
    %v44 = vld [vmem:[#allocation2 + $0x80] sm:$0xff]
    %v45 = vld [vmem:[#allocation2 + $0x88] sm:$0xff]
    %v46 = vld [vmem:[#allocation2 + $0x90] sm:$0xff]
    %v47 = vld [vmem:[#allocation2 + $0x98] sm:$0xff]
    %v48 = vld [vmem:[#allocation2 + $0xa0] sm:$0xff]
    %v49 = vld [vmem:[#allocation2 + $0xa8] sm:$0xff]
    %v50 = vld [vmem:[#allocation2 + $0xb0] sm:$0xff]
    %v51 = vld [vmem:[#allocation2 + $0xb8] sm:$0xff]
    %v52 = vld [vmem:[#allocation2 + $0xc0] sm:$0xff]
    %v53 = vld [vmem:[#allocation2 + $0xc8] sm:$0xff]
    %v54 = vld [vmem:[#allocation2 + $0xd0] sm:$0xff]
    %v55 = vld [vmem:[#allocation2 + $0xd8] sm:$0xff]
    %v56 = vld [vmem:[#allocation2 + $0xe0] sm:$0xff]
    %v57 = vld [vmem:[#allocation2 + $0xe8] sm:$0xff]
    %v58 = vld [vmem:[#allocation2 + $0xf0] sm:$0xff]
    %v59 = vld [vmem:[#allocation2 + $0xf8] sm:$0xff]
    %v60 = vld [vmem:[#allocation2 + $0x100] sm:$0xff]
    %v61 = vld [vmem:[#allocation2 + $0x108] sm:$0xff]
    %v62 = vld [vmem:[#allocation2 + $0x110] sm:$0xff]
    %v63 = vld [vmem:[#allocation2 + $0x118] sm:$0xff]
    %v64 = vld [vmem:[#allocation2 + $0x120] sm:$0xff]
    %v65 = vld [vmem:[#allocation2 + $0x128] sm:$0xff]
    %v66 = vld [vmem:[#allocation2 + $0x130] sm:$0xff]
    %v67 = vld [vmem:[#allocation2 + $0x138] sm:$0xff]
    %v68 = vld [vmem:[#allocation2 + $0x140] sm:$0xff]
    %v69 = vld [vmem:[#allocation2 + $0x148] sm:$0x1]
    %vm70 = vcmask 261120
    %v72 = vsel %vm70, %v25, 0
    %v75 = vsel %vm70, %v26, 0
    %77 = vmatprep.subr.mxu0 0.0
    %78 = vmatpush1.msra.mxu0 0.0
    %79 = vmatprep.subr.mxu0 0.0
    %80 = vmatpush1.msra.mxu0 0.0
    %81 = vmatprep.subr.mxu0 0.0
    %82 = vmatpush1.msra.mxu0 0.0
    %83 = vmatprep.subr.mxu0 0.0
    %84 = vmatpush1.msra.mxu0 0.0
    %85 = vmatprep.subr.mxu0 0.0
    %86 = vmatpush1.msra.mxu0 0.0
    %87 = vmatprep.subr.mxu0 0.0
    %88 = vmatpush1.msra.mxu0 0.0
    %89 = vmatprep.subr.mxu0 0.0
    %90 = vmatpush1.msra.mxu0 0.0
    %91 = vmatprep.subr.mxu0 0.0
    %92 = vmatpush1.msra.mxu0 0.0
    %93 = vmatprep.subr.mxu0 0.0
    %94 = vmatpush1.msra.mxu0 0.0
    %95 = vmatprep.subr.mxu0 0.0
    %96 = vmatpush1.msra.mxu0 0.0
    %97 = vmatprep.subr.mxu0 0.0
    %98 = vmatpush1.msra.mxu0 0.0
    %99 = vmatprep.subr.mxu0 0.0
    %100 = vmatpush1.msra.mxu0 0.0
    %101 = vmatprep.subr.mxu0 0.0
    %102 = vmatpush1.msra.mxu0 %v31
    %103 = vmatprep.subr.mxu0 0.0
    %104 = vmatpush1.msra.mxu0 %v30
    %105 = vmatprep.subr.mxu0 0.0
    %106 = vmatpush1.msra.mxu0 %v29
    %107 = vmatprep.subr.mxu0 0.0
    %108 = vmatpush1.msra.mxu0 %v28
    %109 = vmatprep.subr.mxu0 0.0
    %110 = vmatpush2.msra.mxu0 0.0
    %111 = vmatprep.subr.mxu0 0.0
    %112 = vmatpush2.msra.mxu0 0.0
    %113 = vmatprep.subr.mxu0 0.0
    %114 = vmatpush2.msra.mxu0 0.0
    %115 = vmatprep.subr.mxu0 0.0
    %116 = vmatpush2.msra.mxu0 0.0
    %117 = vmatprep.subr.mxu0 0.0
    %118 = vmatpush2.msra.mxu0 0.0
    %119 = vmatprep.subr.mxu0 0.0
    %120 = vmatpush2.msra.mxu0 0.0
    %121 = vmatprep.subr.mxu0 0.0
    %122 = vmatpush2.msra.mxu0 0.0
    %123 = vmatprep.subr.mxu0 0.0
    %124 = vmatpush2.msra.mxu0 0.0
    %125 = vmatprep.subr.mxu0 0.0
    %126 = vmatpush2.msra.mxu0 0.0
    %127 = vmatprep.subr.mxu0 0.0
    %128 = vmatpush2.msra.mxu0 0.0
    %129 = vmatprep.subr.mxu0 0.0
    %130 = vmatpush2.msra.mxu0 0.0
    %131 = vmatprep.subr.mxu0 0.0
    %132 = vmatpush2.msra.mxu0 0.0
    %133 = vmatprep.subr.mxu0 0.0
    %134 = vmatpush2.msra.mxu0 0.0
    %135 = vmatprep.subr.mxu0 0.0
    %136 = vmatpush2.msra.mxu0 0.0
    %137 = vmatprep.subr.mxu0 0.0
    %138 = vmatpush2.msra.mxu0 0.0
    %139 = vmatprep.subr.mxu0 0.0
    %140 = vmatpush2.msra.mxu0 0.0
    %141 = vmatprep.mubr.f32.mxu0 0.0
    %142 = vmatmul.mubr.f32.gmra.mxu0 %v72
    %v143 = vpop.f32.mrf.mxu0
    %v144 = vadd.f32 0.0, %v143
    %v145 = vpop.f32.mrf.mxu0
    %146 = vmatprep.mubr.f32.mxu0 0.0
    %147 = vmatmul.mubr.f32.gmra.mxu0 %v75
    %v148 = vpop.f32.mrf.mxu0
    %v149 = vadd.f32 0.0, %v148
    %v150 = vpop.f32.mrf.mxu0
    %151 = vdwg.mxu0
    %152 = vmatprep.subr.mxu0 0.0
    %153 = vmatpush1.msra.mxu0 0.0
    %154 = vmatprep.subr.mxu0 0.0
    %155 = vmatpush1.msra.mxu0 0.0
    %156 = vmatprep.subr.mxu0 0.0
    %157 = vmatpush1.msra.mxu0 0.0
    %158 = vmatprep.subr.mxu0 0.0
    %159 = vmatpush1.msra.mxu0 0.0
    %160 = vmatprep.subr.mxu0 0.0
    %161 = vmatpush1.msra.mxu0 0.0
    %162 = vmatprep.subr.mxu0 0.0
    %163 = vmatpush1.msra.mxu0 0.0
    %164 = vmatprep.subr.mxu0 0.0
    %165 = vmatpush1.msra.mxu0 0.0
    %166 = vmatprep.subr.mxu0 0.0
    %167 = vmatpush1.msra.mxu0 0.0
    %168 = vmatprep.subr.mxu0 0.0
    %169 = vmatpush1.msra.mxu0 0.0
    %170 = vmatprep.subr.mxu0 0.0
    %171 = vmatpush1.msra.mxu0 0.0
    %172 = vmatprep.subr.mxu0 0.0
    %173 = vmatpush1.msra.mxu0 0.0
    %174 = vmatprep.subr.mxu0 0.0
    %175 = vmatpush1.msra.mxu0 0.0
    %176 = vmatprep.subr.mxu0 0.0
    %177 = vmatpush1.msra.mxu0 %v35
    %178 = vmatprep.subr.mxu0 0.0
    %179 = vmatpush1.msra.mxu0 %v34
    %180 = vmatprep.subr.mxu0 0.0
    %181 = vmatpush1.msra.mxu0 %v33
    %182 = vmatprep.subr.mxu0 0.0
    %183 = vmatpush1.msra.mxu0 %v32
    %184 = vmatprep.subr.mxu0 0.0
    %185 = vmatpush2.msra.mxu0 0.0
    %186 = vmatprep.subr.mxu0 0.0
    %187 = vmatpush2.msra.mxu0 0.0
    %188 = vmatprep.subr.mxu0 0.0
    %189 = vmatpush2.msra.mxu0 0.0
    %190 = vmatprep.subr.mxu0 0.0
    %191 = vmatpush2.msra.mxu0 0.0
    %192 = vmatprep.subr.mxu0 0.0
    %193 = vmatpush2.msra.mxu0 0.0
    %194 = vmatprep.subr.mxu0 0.0
    %195 = vmatpush2.msra.mxu0 0.0
    %196 = vmatprep.subr.mxu0 0.0
    %197 = vmatpush2.msra.mxu0 0.0
    %198 = vmatprep.subr.mxu0 0.0
    %199 = vmatpush2.msra.mxu0 0.0
    %200 = vmatprep.subr.mxu0 0.0
    %201 = vmatpush2.msra.mxu0 0.0
    %202 = vmatprep.subr.mxu0 0.0
    %203 = vmatpush2.msra.mxu0 0.0
    %204 = vmatprep.subr.mxu0 0.0
    %205 = vmatpush2.msra.mxu0 0.0
    %206 = vmatprep.subr.mxu0 0.0
    %207 = vmatpush2.msra.mxu0 0.0
    %208 = vmatprep.subr.mxu0 0.0
    %209 = vmatpush2.msra.mxu0 0.0
    %210 = vmatprep.subr.mxu0 0.0
    %211 = vmatpush2.msra.mxu0 0.0
    %212 = vmatprep.subr.mxu0 0.0
    %213 = vmatpush2.msra.mxu0 0.0
    %214 = vmatprep.subr.mxu0 0.0
    %215 = vmatpush2.msra.mxu0 0.0
    %216 = vmatprep.mubr.f32.mxu0 0.0
    %217 = vmatmul.mubr.f32.gmra.mxu0 %v72
    %v218 = vpop.f32.mrf.mxu0
    %v219 = vadd.f32 0.0, %v218
    %v220 = vpop.f32.mrf.mxu0
    %221 = vmatprep.mubr.f32.mxu0 0.0
    %222 = vmatmul.mubr.f32.gmra.mxu0 %v75
    %v223 = vpop.f32.mrf.mxu0
    %v224 = vadd.f32 0.0, %v223
    %v225 = vpop.f32.mrf.mxu0
    %226 = vdwg.mxu0
    %227 = vmatprep.subr.mxu0 0.0
    %228 = vmatpush1.msra.mxu0 0.0
    %229 = vmatprep.subr.mxu0 0.0
    %230 = vmatpush1.msra.mxu0 0.0
    %231 = vmatprep.subr.mxu0 0.0
    %232 = vmatpush1.msra.mxu0 0.0
    %233 = vmatprep.subr.mxu0 0.0
    %234 = vmatpush1.msra.mxu0 0.0
    %235 = vmatprep.subr.mxu0 0.0
    %236 = vmatpush1.msra.mxu0 0.0
    %237 = vmatprep.subr.mxu0 0.0
    %238 = vmatpush1.msra.mxu0 0.0
    %239 = vmatprep.subr.mxu0 0.0
    %240 = vmatpush1.msra.mxu0 0.0
    %241 = vmatprep.subr.mxu0 0.0
    %242 = vmatpush1.msra.mxu0 0.0
    %243 = vmatprep.subr.mxu0 0.0
    %244 = vmatpush1.msra.mxu0 0.0
    %245 = vmatprep.subr.mxu0 0.0
    %246 = vmatpush1.msra.mxu0 0.0
    %247 = vmatprep.subr.mxu0 0.0
    %248 = vmatpush1.msra.mxu0 0.0
    %249 = vmatprep.subr.mxu0 0.0
    %250 = vmatpush1.msra.mxu0 0.0
    %251 = vmatprep.subr.mxu0 0.0
    %252 = vmatpush1.msra.mxu0 %v39
    %253 = vmatprep.subr.mxu0 0.0
    %254 = vmatpush1.msra.mxu0 %v38
    %255 = vmatprep.subr.mxu0 0.0
    %256 = vmatpush1.msra.mxu0 %v37
    %257 = vmatprep.subr.mxu0 0.0
    %258 = vmatpush1.msra.mxu0 %v36
    %259 = vmatprep.subr.mxu0 0.0
    %260 = vmatpush2.msra.mxu0 0.0
    %261 = vmatprep.subr.mxu0 0.0
    %262 = vmatpush2.msra.mxu0 0.0
    %263 = vmatprep.subr.mxu0 0.0
    %264 = vmatpush2.msra.mxu0 0.0
    %265 = vmatprep.subr.mxu0 0.0
    %266 = vmatpush2.msra.mxu0 0.0
    %267 = vmatprep.subr.mxu0 0.0
    %268 = vmatpush2.msra.mxu0 0.0
    %269 = vmatprep.subr.mxu0 0.0
    %270 = vmatpush2.msra.mxu0 0.0
    %271 = vmatprep.subr.mxu0 0.0
    %272 = vmatpush2.msra.mxu0 0.0
    %273 = vmatprep.subr.mxu0 0.0
    %274 = vmatpush2.msra.mxu0 0.0
    %275 = vmatprep.subr.mxu0 0.0
    %276 = vmatpush2.msra.mxu0 0.0
    %277 = vmatprep.subr.mxu0 0.0
    %278 = vmatpush2.msra.mxu0 0.0
    %279 = vmatprep.subr.mxu0 0.0
    %280 = vmatpush2.msra.mxu0 0.0
    %281 = vmatprep.subr.mxu0 0.0
    %282 = vmatpush2.msra.mxu0 0.0
    %283 = vmatprep.subr.mxu0 0.0
    %284 = vmatpush2.msra.mxu0 0.0
    %285 = vmatprep.subr.mxu0 0.0
    %286 = vmatpush2.msra.mxu0 0.0
    %287 = vmatprep.subr.mxu0 0.0
    %288 = vmatpush2.msra.mxu0 0.0
    %289 = vmatprep.subr.mxu0 0.0
    %290 = vmatpush2.msra.mxu0 0.0
    %291 = vmatprep.mubr.f32.mxu0 0.0
    %292 = vmatmul.mubr.f32.gmra.mxu0 %v72
    %v293 = vpop.f32.mrf.mxu0
    %v294 = vadd.f32 0.0, %v293
    %v295 = vpop.f32.mrf.mxu0
    %296 = vmatprep.mubr.f32.mxu0 0.0
    %297 = vmatmul.mubr.f32.gmra.mxu0 %v75
    %v298 = vpop.f32.mrf.mxu0
    %v299 = vadd.f32 0.0, %v298
    %v300 = vpop.f32.mrf.mxu0
    %301 = vdwg.mxu0
    %vm302 = vcmask 130048
    %v304 = vsel %vm302, %v40, 0
    %v307 = vsel %vm302, %v41, 0
    %v310 = vsel %vm302, %v42, 0
    %v313 = vsel %vm302, %v43, 0
    %v316 = vsel %vm302, %v44, 0
    %v319 = vsel %vm302, %v45, 0
    %v322 = vsel %vm302, %v46, 0
    %v325 = vsel %vm302, %v47, 0
    %327 = vmatprep.subr.mxu0 0.0
    %328 = vmatpush1.msra.mxu0 0.0
    %329 = vmatprep.subr.mxu0 0.0
    %330 = vmatpush1.msra.mxu0 0.0
    %331 = vmatprep.subr.mxu0 0.0
    %332 = vmatpush1.msra.mxu0 0.0
    %333 = vmatprep.subr.mxu0 0.0
    %334 = vmatpush1.msra.mxu0 0.0
    %335 = vmatprep.subr.mxu0 0.0
    %336 = vmatpush1.msra.mxu0 0.0
    %337 = vmatprep.subr.mxu0 0.0
    %338 = vmatpush1.msra.mxu0 0.0
    %339 = vmatprep.subr.mxu0 0.0
    %340 = vmatpush1.msra.mxu0 0.0
    %341 = vmatprep.subr.mxu0 0.0
    %342 = vmatpush1.msra.mxu0 0.0
    %343 = vmatprep.subr.mxu0 0.0
    %344 = vmatpush1.msra.mxu0 0.0
    %345 = vmatprep.subr.mxu0 0.0
    %346 = vmatpush1.msra.mxu0 0.0
    %347 = vmatprep.subr.mxu0 0.0
    %348 = vmatpush1.msra.mxu0 0.0
    %349 = vmatprep.subr.mxu0 0.0
    %350 = vmatpush1.msra.mxu0 0.0
    %351 = vmatprep.subr.mxu0 0.0
    %352 = vmatpush1.msra.mxu0 0.0
    %353 = vmatprep.subr.mxu0 0.0
    %354 = vmatpush1.msra.mxu0 0.0
    %355 = vmatprep.subr.mxu0 0.0
    %356 = vmatpush1.msra.mxu0 %v149
    %357 = vmatprep.subr.mxu0 0.0
    %358 = vmatpush1.msra.mxu0 %v144
    %359 = vmatprep.subr.mxu0 0.0
    %360 = vmatpush2.msra.mxu0 0.0
    %361 = vmatprep.subr.mxu0 0.0
    %362 = vmatpush2.msra.mxu0 0.0
    %363 = vmatprep.subr.mxu0 0.0
    %364 = vmatpush2.msra.mxu0 0.0
    %365 = vmatprep.subr.mxu0 0.0
    %366 = vmatpush2.msra.mxu0 0.0
    %367 = vmatprep.subr.mxu0 0.0
    %368 = vmatpush2.msra.mxu0 0.0
    %369 = vmatprep.subr.mxu0 0.0
    %370 = vmatpush2.msra.mxu0 0.0
    %371 = vmatprep.subr.mxu0 0.0
    %372 = vmatpush2.msra.mxu0 0.0
    %373 = vmatprep.subr.mxu0 0.0
    %374 = vmatpush2.msra.mxu0 0.0
    %375 = vmatprep.subr.mxu0 0.0
    %376 = vmatpush2.msra.mxu0 0.0
    %377 = vmatprep.subr.mxu0 0.0
    %378 = vmatpush2.msra.mxu0 0.0
    %379 = vmatprep.subr.mxu0 0.0
    %380 = vmatpush2.msra.mxu0 0.0
    %381 = vmatprep.subr.mxu0 0.0
    %382 = vmatpush2.msra.mxu0 0.0
    %383 = vmatprep.subr.mxu0 0.0
    %384 = vmatpush2.msra.mxu0 0.0
    %385 = vmatprep.subr.mxu0 0.0
    %386 = vmatpush2.msra.mxu0 0.0
    %387 = vmatprep.subr.mxu0 0.0
    %388 = vmatpush2.msra.mxu0 0.0
    %389 = vmatprep.subr.mxu0 0.0
    %390 = vmatpush2.msra.mxu0 0.0
    %391 = vmatprep.mubr.f32.mxu0 0.0
    %392 = vmatmul.mubr.f32.gmra.mxu0 %v304
    %v393 = vpop.f32.mrf.mxu0
    %v394 = vadd.f32 0.0, %v393
    %v395 = vpop.f32.mrf.mxu0
    %396 = vmatprep.mubr.f32.mxu0 0.0
    %397 = vmatmul.mubr.f32.gmra.mxu0 %v307
    %v398 = vpop.f32.mrf.mxu0
    %v399 = vadd.f32 0.0, %v398
    %v400 = vpop.f32.mrf.mxu0
    %401 = vmatprep.mubr.f32.mxu0 0.0
    %402 = vmatmul.mubr.f32.gmra.mxu0 %v310
    %v403 = vpop.f32.mrf.mxu0
    %v404 = vadd.f32 0.0, %v403
    %v405 = vpop.f32.mrf.mxu0
    %406 = vmatprep.mubr.f32.mxu0 0.0
    %407 = vmatmul.mubr.f32.gmra.mxu0 %v313
    %v408 = vpop.f32.mrf.mxu0
    %v409 = vadd.f32 0.0, %v408
    %v410 = vpop.f32.mrf.mxu0
    %411 = vmatprep.mubr.f32.mxu0 0.0
    %412 = vmatmul.mubr.f32.gmra.mxu0 %v316
    %v413 = vpop.f32.mrf.mxu0
    %v414 = vadd.f32 0.0, %v413
    %v415 = vpop.f32.mrf.mxu0
    %416 = vmatprep.mubr.f32.mxu0 0.0
    %417 = vmatmul.mubr.f32.gmra.mxu0 %v319
    %v418 = vpop.f32.mrf.mxu0
    %v419 = vadd.f32 0.0, %v418
    %v420 = vpop.f32.mrf.mxu0
    %421 = vmatprep.mubr.f32.mxu0 0.0
    %422 = vmatmul.mubr.f32.gmra.mxu0 %v322
    %v423 = vpop.f32.mrf.mxu0
    %v424 = vadd.f32 0.0, %v423
    %v425 = vpop.f32.mrf.mxu0
    %426 = vmatprep.mubr.f32.mxu0 0.0
    %427 = vmatmul.mubr.f32.gmra.mxu0 %v325
    %v428 = vpop.f32.mrf.mxu0
    %v429 = vadd.f32 0.0, %v428
    %v430 = vpop.f32.mrf.mxu0
    %431 = vdwg.mxu0
    %v432 = vmul.f32 %v394, %v48
    %v433 = vmul.f32 %v399, %v49
    %v434 = vmul.f32 %v404, %v50
    %v435 = vmul.f32 %v409, %v51
    %v436 = vmul.f32 %v414, %v52
    %v437 = vmul.f32 %v419, %v53
    %v438 = vmul.f32 %v424, %v54
    %v439 = vmul.f32 %v429, %v55
    %v441 = vsel %vm70, %v432, 0
    %v444 = vsel %vm70, %v433, 0
    %v447 = vsel %vm70, %v434, 0
    %v450 = vsel %vm70, %v435, 0
    %v453 = vsel %vm70, %v436, 0
    %v456 = vsel %vm70, %v437, 0
    %v459 = vsel %vm70, %v438, 0
    %v462 = vsel %vm70, %v439, 0
    %v465 = vsel %vm70, %v219, 0
    %v468 = vsel %vm70, %v224, 0
    %470 = vmatprep.subr.mxu0 0.0
    %471 = vmatpush1.xpose.msra.mxu0 0.0
    %472 = vmatprep.subr.mxu0 0.0
    %473 = vmatpush1.xpose.msra.mxu0 0.0
    %474 = vmatprep.subr.mxu0 0.0
    %475 = vmatpush1.xpose.msra.mxu0 0.0
    %476 = vmatprep.subr.mxu0 0.0
    %477 = vmatpush1.xpose.msra.mxu0 0.0
    %478 = vmatprep.subr.mxu0 0.0
    %479 = vmatpush1.xpose.msra.mxu0 0.0
    %480 = vmatprep.subr.mxu0 0.0
    %481 = vmatpush1.xpose.msra.mxu0 0.0
    %482 = vmatprep.subr.mxu0 0.0
    %483 = vmatpush1.xpose.msra.mxu0 0.0
    %484 = vmatprep.subr.mxu0 0.0
    %485 = vmatpush1.xpose.msra.mxu0 0.0
    %486 = vmatprep.subr.mxu0 0.0
    %487 = vmatpush1.xpose.msra.mxu0 0.0
    %488 = vmatprep.subr.mxu0 0.0
    %489 = vmatpush1.xpose.msra.mxu0 0.0
    %490 = vmatprep.subr.mxu0 0.0
    %491 = vmatpush1.xpose.msra.mxu0 0.0
    %492 = vmatprep.subr.mxu0 0.0
    %493 = vmatpush1.xpose.msra.mxu0 0.0
    %494 = vmatprep.subr.mxu0 0.0
    %495 = vmatpush1.xpose.msra.mxu0 0.0
    %496 = vmatprep.subr.mxu0 0.0
    %497 = vmatpush1.xpose.msra.mxu0 0.0
    %498 = vmatprep.subr.mxu0 0.0
    %499 = vmatpush1.xpose.msra.mxu0 %v468
    %500 = vmatprep.subr.mxu0 0.0
    %501 = vmatpush1.xpose.msra.mxu0 %v465
    %502 = vmatprep.subr.mxu0 0.0
    %503 = vmatpush2.xpose.msra.mxu0 0.0
    %504 = vmatprep.subr.mxu0 0.0
    %505 = vmatpush2.xpose.msra.mxu0 0.0
    %506 = vmatprep.subr.mxu0 0.0
    %507 = vmatpush2.xpose.msra.mxu0 0.0
    %508 = vmatprep.subr.mxu0 0.0
    %509 = vmatpush2.xpose.msra.mxu0 0.0
    %510 = vmatprep.subr.mxu0 0.0
    %511 = vmatpush2.xpose.msra.mxu0 0.0
    %512 = vmatprep.subr.mxu0 0.0
    %513 = vmatpush2.xpose.msra.mxu0 0.0
    %514 = vmatprep.subr.mxu0 0.0
    %515 = vmatpush2.xpose.msra.mxu0 0.0
    %516 = vmatprep.subr.mxu0 0.0
    %517 = vmatpush2.xpose.msra.mxu0 0.0
    %518 = vmatprep.subr.mxu0 0.0
    %519 = vmatpush2.xpose.msra.mxu0 0.0
    %520 = vmatprep.subr.mxu0 0.0
    %521 = vmatpush2.xpose.msra.mxu0 0.0
    %522 = vmatprep.subr.mxu0 0.0
    %523 = vmatpush2.xpose.msra.mxu0 0.0
    %524 = vmatprep.subr.mxu0 0.0
    %525 = vmatpush2.xpose.msra.mxu0 0.0
    %526 = vmatprep.subr.mxu0 0.0
    %527 = vmatpush2.xpose.msra.mxu0 0.0
    %528 = vmatprep.subr.mxu0 0.0
    %529 = vmatpush2.xpose.msra.mxu0 0.0
    %530 = vmatprep.subr.mxu0 0.0
    %531 = vmatpush2.xpose.msra.mxu0 0.0
    %532 = vmatprep.subr.mxu0 0.0
    %533 = vmatpush2.xpose.msra.mxu0 0.0
    %534 = vmatprep.mubr.f32.mxu0 0.0
    %535 = vmatmul.mubr.f32.gmra.mxu0 %v441
    %v536 = vpop.f32.mrf.mxu0
    %v537 = vadd.f32 %v56, %v536
    %v538 = vpop.f32.mrf.mxu0
    %539 = vmatprep.mubr.f32.mxu0 0.0
    %540 = vmatmul.mubr.f32.gmra.mxu0 %v444
    %v541 = vpop.f32.mrf.mxu0
    %v542 = vadd.f32 %v57, %v541
    %v543 = vpop.f32.mrf.mxu0
    %544 = vmatprep.mubr.f32.mxu0 0.0
    %545 = vmatmul.mubr.f32.gmra.mxu0 %v447
    %v546 = vpop.f32.mrf.mxu0
    %v547 = vadd.f32 %v58, %v546
    %v548 = vpop.f32.mrf.mxu0
    %549 = vmatprep.mubr.f32.mxu0 0.0
    %550 = vmatmul.mubr.f32.gmra.mxu0 %v450
    %v551 = vpop.f32.mrf.mxu0
    %v552 = vadd.f32 %v59, %v551
    %v553 = vpop.f32.mrf.mxu0
    %554 = vmatprep.mubr.f32.mxu0 0.0
    %555 = vmatmul.mubr.f32.gmra.mxu0 %v453
    %v556 = vpop.f32.mrf.mxu0
    %v557 = vadd.f32 %v60, %v556
    %v558 = vpop.f32.mrf.mxu0
    %559 = vmatprep.mubr.f32.mxu0 0.0
    %560 = vmatmul.mubr.f32.gmra.mxu0 %v456
    %v561 = vpop.f32.mrf.mxu0
    %v562 = vadd.f32 %v61, %v561
    %v563 = vpop.f32.mrf.mxu0
    %564 = vmatprep.mubr.f32.mxu0 0.0
    %565 = vmatmul.mubr.f32.gmra.mxu0 %v459
    %v566 = vpop.f32.mrf.mxu0
    %v567 = vadd.f32 %v62, %v566
    %v568 = vpop.f32.mrf.mxu0
    %569 = vmatprep.mubr.f32.mxu0 0.0
    %570 = vmatmul.mubr.f32.gmra.mxu0 %v462
    %v571 = vpop.f32.mrf.mxu0
    %v572 = vadd.f32 %v63, %v571
    %v573 = vpop.f32.mrf.mxu0
    %574 = vdwg.mxu0
    %v575 = vlaneseq
    %v576 = vshrl.u32 %v575, 7
    %v577 = vsub.s32 0, %v576
    %v578 = vrot.slane %v27, %v577
    %v579 = vadd.f32 %v537, %v578
    %v580 = vadd.f32 %v542, %v578
    %v581 = vadd.f32 %v547, %v578
    %v582 = vadd.f32 %v552, %v578
    %v583 = vadd.f32 %v557, %v578
    %v584 = vadd.f32 %v562, %v578
    %v585 = vadd.f32 %v567, %v578
    %v586 = vadd.f32 %v572, %v578
    %v587 = vsel %vm302, %v579, -inf
    %588 = vmax.xlane.f32.xlu0 %v587
    %v589 = vpop.xlane.xlu0 %588
    %v590 = vsel %vm302, %v580, -inf
    %591 = vmax.xlane.f32.xlu0 %v590
    %v592 = vpop.xlane.xlu0 %591
    %v593 = vsel %vm302, %v581, -inf
    %594 = vmax.xlane.f32.xlu0 %v593
    %v595 = vpop.xlane.xlu0 %594
    %v596 = vsel %vm302, %v582, -inf
    %597 = vmax.xlane.f32.xlu0 %v596
    %v598 = vpop.xlane.xlu0 %597
    %v599 = vsel %vm302, %v583, -inf
    %600 = vmax.xlane.f32.xlu0 %v599
    %v601 = vpop.xlane.xlu0 %600
    %v602 = vsel %vm302, %v584, -inf
    %603 = vmax.xlane.f32.xlu0 %v602
    %v604 = vpop.xlane.xlu0 %603
    %v605 = vsel %vm302, %v585, -inf
    %606 = vmax.xlane.f32.xlu0 %v605
    %v607 = vpop.xlane.xlu0 %606
    %v608 = vsel %vm302, %v586, -inf
    %609 = vmax.xlane.f32.xlu0 %v608
    %v610 = vpop.xlane.xlu0 %609
    %v611 = vsub.f32 %v579, %v589
    %v612 = vsub.f32 %v580, %v592
    %v613 = vsub.f32 %v581, %v595
    %v614 = vsub.f32 %v582, %v598
    %v615 = vsub.f32 %v583, %v601
    %v616 = vsub.f32 %v584, %v604
    %v617 = vsub.f32 %v585, %v607
    %v618 = vsub.f32 %v586, %v610
    %v619 = vmul.f32 %v611, 1.442695
    %v620 = vpow.pop %v619
    %v621 = vmul.f32 %v612, 1.442695
    %v622 = vpow.pop %v621
    %v623 = vmul.f32 %v613, 1.442695
    %v624 = vpow.pop %v623
    %v625 = vmul.f32 %v614, 1.442695
    %v626 = vpow.pop %v625
    %v627 = vmul.f32 %v615, 1.442695
    %v628 = vpow.pop %v627
    %v629 = vmul.f32 %v616, 1.442695
    %v630 = vpow.pop %v629
    %v631 = vmul.f32 %v617, 1.442695
    %v632 = vpow.pop %v631
    %v633 = vmul.f32 %v618, 1.442695
    %v634 = vpow.pop %v633
    %v635 = vsel %vm302, %v620, 0.0
    %636 = vadd.xlane.f32.xlu0 %v635
    %v637 = vpop.xlane.xlu0 %636
    %v638 = vsel %vm302, %v622, 0.0
    %639 = vadd.xlane.f32.xlu0 %v638
    %v640 = vpop.xlane.xlu0 %639
    %v641 = vsel %vm302, %v624, 0.0
    %642 = vadd.xlane.f32.xlu0 %v641
    %v643 = vpop.xlane.xlu0 %642
    %v644 = vsel %vm302, %v626, 0.0
    %645 = vadd.xlane.f32.xlu0 %v644
    %v646 = vpop.xlane.xlu0 %645
    %v647 = vsel %vm302, %v628, 0.0
    %648 = vadd.xlane.f32.xlu0 %v647
    %v649 = vpop.xlane.xlu0 %648
    %v650 = vsel %vm302, %v630, 0.0
    %651 = vadd.xlane.f32.xlu0 %v650
    %v652 = vpop.xlane.xlu0 %651
    %v653 = vsel %vm302, %v632, 0.0
    %654 = vadd.xlane.f32.xlu0 %v653
    %v655 = vpop.xlane.xlu0 %654
    %v656 = vsel %vm302, %v634, 0.0
    %657 = vadd.xlane.f32.xlu0 %v656
    %v658 = vpop.xlane.xlu0 %657
    %v659 = vrcp.pop %v637
    %v660 = vrcp.pop %v640
    %v661 = vrcp.pop %v643
    %v662 = vrcp.pop %v646
    %v663 = vrcp.pop %v649
    %v664 = vrcp.pop %v652
    %v665 = vrcp.pop %v655
    %v666 = vrcp.pop %v658
    %v667 = vmul.f32 %v620, %v659
    %v668 = vmul.f32 %v622, %v660
    %v669 = vmul.f32 %v624, %v661
    %v670 = vmul.f32 %v626, %v662
    %v671 = vmul.f32 %v628, %v663
    %v672 = vmul.f32 %v630, %v664
    %v673 = vmul.f32 %v632, %v665
    %v674 = vmul.f32 %v634, %v666
    %v676 = vsel %vm302, %v667, 0
    %v679 = vsel %vm302, %v668, 0
    %v682 = vsel %vm302, %v669, 0
    %v685 = vsel %vm302, %v670, 0
    %v688 = vsel %vm302, %v671, 0
    %v691 = vsel %vm302, %v672, 0
    %v694 = vsel %vm302, %v673, 0
    %v697 = vsel %vm302, %v674, 0
    %699 = vmatprep.subr.mxu0 0.0
    %700 = vmatpush1.msra.mxu0 0.0
    %701 = vmatprep.subr.mxu0 0.0
    %702 = vmatpush1.msra.mxu0 0.0
    %703 = vmatprep.subr.mxu0 0.0
    %704 = vmatpush1.msra.mxu0 0.0
    %705 = vmatprep.subr.mxu0 0.0
    %706 = vmatpush1.msra.mxu0 0.0
    %707 = vmatprep.subr.mxu0 0.0
    %708 = vmatpush1.msra.mxu0 0.0
    %709 = vmatprep.subr.mxu0 0.0
    %710 = vmatpush1.msra.mxu0 0.0
    %711 = vmatprep.subr.mxu0 0.0
    %712 = vmatpush1.msra.mxu0 0.0
    %713 = vmatprep.subr.mxu0 0.0
    %714 = vmatpush1.msra.mxu0 0.0
    %715 = vmatprep.subr.mxu0 0.0
    %716 = vmatpush1.msra.mxu0 0.0
    %717 = vmatprep.subr.mxu0 0.0
    %718 = vmatpush1.msra.mxu0 0.0
    %719 = vmatprep.subr.mxu0 0.0
    %720 = vmatpush1.msra.mxu0 0.0
    %721 = vmatprep.subr.mxu0 0.0
    %722 = vmatpush1.msra.mxu0 0.0
    %723 = vmatprep.subr.mxu0 0.0
    %724 = vmatpush1.msra.mxu0 0.0
    %725 = vmatprep.subr.mxu0 0.0
    %726 = vmatpush1.msra.mxu0 0.0
    %727 = vmatprep.subr.mxu0 0.0
    %728 = vmatpush1.msra.mxu0 %v299
    %729 = vmatprep.subr.mxu0 0.0
    %730 = vmatpush1.msra.mxu0 %v294
    %731 = vmatprep.subr.mxu0 0.0
    %732 = vmatpush2.msra.mxu0 0.0
    %733 = vmatprep.subr.mxu0 0.0
    %734 = vmatpush2.msra.mxu0 0.0
    %735 = vmatprep.subr.mxu0 0.0
    %736 = vmatpush2.msra.mxu0 0.0
    %737 = vmatprep.subr.mxu0 0.0
    %738 = vmatpush2.msra.mxu0 0.0
    %739 = vmatprep.subr.mxu0 0.0
    %740 = vmatpush2.msra.mxu0 0.0
    %741 = vmatprep.subr.mxu0 0.0
    %742 = vmatpush2.msra.mxu0 0.0
    %743 = vmatprep.subr.mxu0 0.0
    %744 = vmatpush2.msra.mxu0 0.0
    %745 = vmatprep.subr.mxu0 0.0
    %746 = vmatpush2.msra.mxu0 0.0
    %747 = vmatprep.subr.mxu0 0.0
    %748 = vmatpush2.msra.mxu0 0.0
    %749 = vmatprep.subr.mxu0 0.0
    %750 = vmatpush2.msra.mxu0 0.0
    %751 = vmatprep.subr.mxu0 0.0
    %752 = vmatpush2.msra.mxu0 0.0
    %753 = vmatprep.subr.mxu0 0.0
    %754 = vmatpush2.msra.mxu0 0.0
    %755 = vmatprep.subr.mxu0 0.0
    %756 = vmatpush2.msra.mxu0 0.0
    %757 = vmatprep.subr.mxu0 0.0
    %758 = vmatpush2.msra.mxu0 0.0
    %759 = vmatprep.subr.mxu0 0.0
    %760 = vmatpush2.msra.mxu0 0.0
    %761 = vmatprep.subr.mxu0 0.0
    %762 = vmatpush2.msra.mxu0 0.0
    %763 = vmatprep.mubr.f32.mxu0 0.0
    %764 = vmatmul.mubr.f32.gmra.mxu0 %v676
    %v765 = vpop.f32.mrf.mxu0
    %v766 = vadd.f32 0.0, %v765
    %v767 = vpop.f32.mrf.mxu0
    %768 = vmatprep.mubr.f32.mxu0 0.0
    %769 = vmatmul.mubr.f32.gmra.mxu0 %v679
    %v770 = vpop.f32.mrf.mxu0
    %v771 = vadd.f32 0.0, %v770
    %v772 = vpop.f32.mrf.mxu0
    %773 = vmatprep.mubr.f32.mxu0 0.0
    %774 = vmatmul.mubr.f32.gmra.mxu0 %v682
    %v775 = vpop.f32.mrf.mxu0
    %v776 = vadd.f32 0.0, %v775
    %v777 = vpop.f32.mrf.mxu0
    %778 = vmatprep.mubr.f32.mxu0 0.0
    %779 = vmatmul.mubr.f32.gmra.mxu0 %v685
    %v780 = vpop.f32.mrf.mxu0
    %v781 = vadd.f32 0.0, %v780
    %v782 = vpop.f32.mrf.mxu0
    %783 = vmatprep.mubr.f32.mxu0 0.0
    %784 = vmatmul.mubr.f32.gmra.mxu0 %v688
    %v785 = vpop.f32.mrf.mxu0
    %v786 = vadd.f32 0.0, %v785
    %v787 = vpop.f32.mrf.mxu0
    %788 = vmatprep.mubr.f32.mxu0 0.0
    %789 = vmatmul.mubr.f32.gmra.mxu0 %v691
    %v790 = vpop.f32.mrf.mxu0
    %v791 = vadd.f32 0.0, %v790
    %v792 = vpop.f32.mrf.mxu0
    %793 = vmatprep.mubr.f32.mxu0 0.0
    %794 = vmatmul.mubr.f32.gmra.mxu0 %v694
    %v795 = vpop.f32.mrf.mxu0
    %v796 = vadd.f32 0.0, %v795
    %v797 = vpop.f32.mrf.mxu0
    %798 = vmatprep.mubr.f32.mxu0 0.0
    %799 = vmatmul.mubr.f32.gmra.mxu0 %v697
    %v800 = vpop.f32.mrf.mxu0
    %v801 = vadd.f32 0.0, %v800
    %v802 = vpop.f32.mrf.mxu0
    %803 = vdwg.mxu0
    %v804 = vmul.f32 %v766, %v48
    %v805 = vmul.f32 %v771, %v49
    %v806 = vmul.f32 %v776, %v50
    %v807 = vmul.f32 %v781, %v51
    %v808 = vmul.f32 %v786, %v52
    %v809 = vmul.f32 %v791, %v53
    %v810 = vmul.f32 %v796, %v54
    %v811 = vmul.f32 %v801, %v55
    %vm812 = vcmask 523264
    %v814 = vsel %vm812, %v64, 0
    %816 = vmatprep.subr.mxu0 0.0
    %817 = vmatpush1.msra.mxu0 0.0
    %818 = vmatprep.subr.mxu0 0.0
    %819 = vmatpush1.msra.mxu0 0.0
    %820 = vmatprep.subr.mxu0 0.0
    %821 = vmatpush1.msra.mxu0 0.0
    %822 = vmatprep.subr.mxu0 0.0
    %823 = vmatpush1.msra.mxu0 0.0
    %824 = vmatprep.subr.mxu0 0.0
    %825 = vmatpush1.msra.mxu0 0.0
    %826 = vmatprep.subr.mxu0 0.0
    %827 = vmatpush1.msra.mxu0 0.0
    %828 = vmatprep.subr.mxu0 0.0
    %829 = vmatpush1.msra.mxu0 0.0
    %830 = vmatprep.subr.mxu0 0.0
    %831 = vmatpush1.msra.mxu0 0.0
    %832 = vmatprep.subr.mxu0 0.0
    %833 = vmatpush1.msra.mxu0 %v811
    %834 = vmatprep.subr.mxu0 0.0
    %835 = vmatpush1.msra.mxu0 %v810
    %836 = vmatprep.subr.mxu0 0.0
    %837 = vmatpush1.msra.mxu0 %v809
    %838 = vmatprep.subr.mxu0 0.0
    %839 = vmatpush1.msra.mxu0 %v808
    %840 = vmatprep.subr.mxu0 0.0
    %841 = vmatpush1.msra.mxu0 %v807
    %842 = vmatprep.subr.mxu0 0.0
    %843 = vmatpush1.msra.mxu0 %v806
    %844 = vmatprep.subr.mxu0 0.0
    %845 = vmatpush1.msra.mxu0 %v805
    %846 = vmatprep.subr.mxu0 0.0
    %847 = vmatpush1.msra.mxu0 %v804
    %848 = vmatprep.subr.mxu0 0.0
    %849 = vmatpush2.msra.mxu0 0.0
    %850 = vmatprep.subr.mxu0 0.0
    %851 = vmatpush2.msra.mxu0 0.0
    %852 = vmatprep.subr.mxu0 0.0
    %853 = vmatpush2.msra.mxu0 0.0
    %854 = vmatprep.subr.mxu0 0.0
    %855 = vmatpush2.msra.mxu0 0.0
    %856 = vmatprep.subr.mxu0 0.0
    %857 = vmatpush2.msra.mxu0 0.0
    %858 = vmatprep.subr.mxu0 0.0
    %859 = vmatpush2.msra.mxu0 0.0
    %860 = vmatprep.subr.mxu0 0.0
    %861 = vmatpush2.msra.mxu0 0.0
    %862 = vmatprep.subr.mxu0 0.0
    %863 = vmatpush2.msra.mxu0 0.0
    %864 = vmatprep.subr.mxu0 0.0
    %865 = vmatpush2.msra.mxu0 0.0
    %866 = vmatprep.subr.mxu0 0.0
    %867 = vmatpush2.msra.mxu0 0.0
    %868 = vmatprep.subr.mxu0 0.0
    %869 = vmatpush2.msra.mxu0 0.0
    %870 = vmatprep.subr.mxu0 0.0
    %871 = vmatpush2.msra.mxu0 0.0
    %872 = vmatprep.subr.mxu0 0.0
    %873 = vmatpush2.msra.mxu0 0.0
    %874 = vmatprep.subr.mxu0 0.0
    %875 = vmatpush2.msra.mxu0 0.0
    %876 = vmatprep.subr.mxu0 0.0
    %877 = vmatpush2.msra.mxu0 0.0
    %878 = vmatprep.subr.mxu0 0.0
    %879 = vmatpush2.msra.mxu0 0.0
    %880 = vmatprep.mubr.f32.mxu0 0.0
    %881 = vmatmul.mubr.f32.gmra.mxu0 %v814
    %v882 = vpop.f32.mrf.mxu0
    %v883 = vadd.f32 0.0, %v882
    %v884 = vpop.f32.mrf.mxu0
    %885 = vdwg.mxu0
    %v886 = vlaneseq
    %v887 = vshrl.u32 %v886, 7
    %v888 = vsub.s32 0, %v887
    %v889 = vrot.slane %v69, %v888
    %v891 = vsel %vm70, %v883, 0
    %893 = vmatprep.subr.mxu0 0.0
    %894 = vmatpush1.msra.mxu0 0.0
    %895 = vmatprep.subr.mxu0 0.0
    %896 = vmatpush1.msra.mxu0 0.0
    %897 = vmatprep.subr.mxu0 0.0
    %898 = vmatpush1.msra.mxu0 0.0
    %899 = vmatprep.subr.mxu0 0.0
    %900 = vmatpush1.msra.mxu0 0.0
    %901 = vmatprep.subr.mxu0 0.0
    %902 = vmatpush1.msra.mxu0 0.0
    %903 = vmatprep.subr.mxu0 0.0
    %904 = vmatpush1.msra.mxu0 0.0
    %905 = vmatprep.subr.mxu0 0.0
    %906 = vmatpush1.msra.mxu0 0.0
    %907 = vmatprep.subr.mxu0 0.0
    %908 = vmatpush1.msra.mxu0 0.0
    %909 = vmatprep.subr.mxu0 0.0
    %910 = vmatpush1.msra.mxu0 0.0
    %911 = vmatprep.subr.mxu0 0.0
    %912 = vmatpush1.msra.mxu0 0.0
    %913 = vmatprep.subr.mxu0 0.0
    %914 = vmatpush1.msra.mxu0 0.0
    %915 = vmatprep.subr.mxu0 0.0
    %916 = vmatpush1.msra.mxu0 0.0
    %917 = vmatprep.subr.mxu0 0.0
    %918 = vmatpush1.msra.mxu0 %v68
    %919 = vmatprep.subr.mxu0 0.0
    %920 = vmatpush1.msra.mxu0 %v67
    %921 = vmatprep.subr.mxu0 0.0
    %922 = vmatpush1.msra.mxu0 %v66
    %923 = vmatprep.subr.mxu0 0.0
    %924 = vmatpush1.msra.mxu0 %v65
    %925 = vmatprep.subr.mxu0 0.0
    %926 = vmatpush2.msra.mxu0 0.0
    %927 = vmatprep.subr.mxu0 0.0
    %928 = vmatpush2.msra.mxu0 0.0
    %929 = vmatprep.subr.mxu0 0.0
    %930 = vmatpush2.msra.mxu0 0.0
    %931 = vmatprep.subr.mxu0 0.0
    %932 = vmatpush2.msra.mxu0 0.0
    %933 = vmatprep.subr.mxu0 0.0
    %934 = vmatpush2.msra.mxu0 0.0
    %935 = vmatprep.subr.mxu0 0.0
    %936 = vmatpush2.msra.mxu0 0.0
    %937 = vmatprep.subr.mxu0 0.0
    %938 = vmatpush2.msra.mxu0 0.0
    %939 = vmatprep.subr.mxu0 0.0
    %940 = vmatpush2.msra.mxu0 0.0
    %941 = vmatprep.subr.mxu0 0.0
    %942 = vmatpush2.msra.mxu0 0.0
    %943 = vmatprep.subr.mxu0 0.0
    %944 = vmatpush2.msra.mxu0 0.0
    %945 = vmatprep.subr.mxu0 0.0
    %946 = vmatpush2.msra.mxu0 0.0
    %947 = vmatprep.subr.mxu0 0.0
    %948 = vmatpush2.msra.mxu0 0.0
    %949 = vmatprep.subr.mxu0 0.0
    %950 = vmatpush2.msra.mxu0 0.0
    %951 = vmatprep.subr.mxu0 0.0
    %952 = vmatpush2.msra.mxu0 0.0
    %953 = vmatprep.subr.mxu0 0.0
    %954 = vmatpush2.msra.mxu0 0.0
    %955 = vmatprep.subr.mxu0 0.0
    %956 = vmatpush2.msra.mxu0 0.0
    %957 = vmatprep.mubr.f32.mxu0 0.0
    %958 = vmatmul.mubr.f32.gmra.mxu0 %v891
    %v959 = vpop.f32.mrf.mxu0
    %v960 = vadd.f32 %v889, %v959
    %v961 = vpop.f32.mrf.mxu0
    %962 = vdwg.mxu0
    %963 = vmax.xlane.f32.xlu0 %v960
    %v964 = vpop.xlane.xlu0 %963
    %v965 = vsub.f32 %v960, %v964
    %v966 = vmul.f32 %v965, 1.442695
    %v967 = vpow.pop %v966
    %968 = vadd.xlane.f32.xlu0 %v967
    %v969 = vpop.xlane.xlu0 %968
    %v970 = vlog2.pop %v969
    %v971 = vmul.f32 %v970, 0.6931472
    %v972 = vsub.f32 %v965, %v971
    %973 = vst [vmem:[%s2] sm:$0xff] %v972
    // Predicated region
    $region14: #{aspect_extraction_forward.1} parent=1 // pred_check
      _
    $region15: #{aspect_extraction_forward.1} parent=1 // pred_check_branch
      %975 = sbr.rel (0) target = $region17
    $region16: #{aspect_extraction_forward.1} parent=1 // pred_region
      _
    $region17: #{aspect_extraction_forward.1} parent=1 // pred_fallthru
      _
    // Predicated region
    $region18: #{aspect_extraction_forward.1} parent=1 // pred_check
      _
    $region19: #{aspect_extraction_forward.1} parent=1 // pred_check_branch
      %977 = sbr.rel (0) target = $region21
    $region20: #{aspect_extraction_forward.1} parent=1 // pred_region
      _
    $region21: #{aspect_extraction_forward.1} parent=1 // pred_fallthru
      _
    %978 = vsyncpa [#allocation3], 1

</llo_original>
